<compile_context>
chip_gen: v5e
topology: v5e:2x2
jax: 0.10.0
libtpu: 0.0.40
codegen_flags: <defaults>
</compile_context>

<pallas_src>
import functools

import jax
import jax.numpy as jnp
from jax import lax
from jax.experimental import pallas as pl
from jax.experimental.pallas import tpu as pltpu


def _fused_dynaconv_kernel(lat_ref, w_ref, bl_ref, x_ref, o_ref, ks_ref, *,
                           fin, fout, tb, recompute_ks, lat_blocked):
    """One grid step: tb samples x thw flattened-spatial positions.

    lat_ref : (tb, L) block, or full (B, L) when lat_blocked is False
    w_ref   : (KB, L)          full nn.Linear weight, KB = fout*fin + fout
    bl_ref  : (1, KB)          nn.Linear bias
    x_ref   : (tb*fin,  thw)   dense input block  (row s*fin  + i)
    o_ref   : (tb*fout, thw)   dense output block (row s*fout + o)
    ks_ref  : (tb, KB) f32     VMEM scratch holding the generated weights
    """
    k_size = fout * fin

    def gen_ks():
        if lat_blocked:
            lat_blk = lat_ref[...]
        else:
            b0 = pl.multiple_of(pl.program_id(0) * tb, tb)
            lat_blk = lat_ref[pl.ds(b0, tb), :]
        # bf16 / f32 operands go straight to the MXU; accumulate in f32.
        ks_ref[...] = lax.dot_general(
            lat_blk, w_ref[...],
            dimension_numbers=(((1,), (1,)), ((), ())),
            preferred_element_type=jnp.float32,
        ) + bl_ref[...].astype(jnp.float32)

    if recompute_ks:
        gen_ks()                                   # HW axis stays "parallel"
    else:
        @pl.when(pl.program_id(1) == 0)            # once per batch tile
        def _():
            gen_ks()

    ks = ks_ref[...]                               # (tb, KB) f32

    if fin * fout <= 256:
        # --- tiny-channel path: VPU broadcast multiply-add -------------------
        # Hoisted: each input channel plane is loaded & cast exactly once.
        x_ch = [x_ref[pl.ds(i, tb, stride=fin), :].astype(jnp.float32)
                for i in range(fin)]               # fin x (tb, thw)
        for o in range(fout):
            acc = ks[:, o * fin:o * fin + 1] * x_ch[0]
            for i in range(1, fin):
                acc = acc + ks[:, o * fin + i:o * fin + i + 1] * x_ch[i]
            acc = acc + ks[:, k_size + o:k_size + o + 1]      # per-sample bias
            o_ref[pl.ds(o, tb, stride=fout), :] = acc.astype(o_ref.dtype)
    else:
        # --- large-channel path: per-sample MXU matmul ------------------------
        # Contiguous per-sample row slices; no cross-sample reshape.
        # TODO(synk): for very large fout*fin*L, K-tile W instead of keeping the
        #             full (KB, L) block resident.
        for s in range(tb):
            k_s = ks[s, :k_size].reshape(fout, fin)
            x_s = x_ref[pl.ds(s * fin, fin), :].astype(jnp.float32)
            y_s = jnp.dot(k_s, x_s, preferred_element_type=jnp.float32)
            y_s = y_s + ks[s, k_size:][:, None]
            o_ref[pl.ds(s * fout, fout), :] = y_s.astype(o_ref.dtype)


def _vmem_plan():
    """(block-buffer budget, vmem_limit_bytes) — TPU-generation aware."""
    cap = None
    try:
        cap = int(pltpu.get_tpu_info().vmem_capacity_bytes)
    except Exception:
        cap = None
    if cap is None or cap <= 64 * 1024 * 1024:         # v7x (64 MiB) or unknown
        return 16 * 1024 * 1024, 48 * 1024 * 1024
    return 24 * 1024 * 1024, 64 * 1024 * 1024          # v5e / v6e (128 MiB)


def _pick_tb(batch, fin, fout):
    """Samples per grid step: divisor of batch, <= 8 preferred, keeping the
    dense (tb*fin, thw)/(tb*fout, thw) blocks sublane-legal."""
    def ok(tb):
        return (batch % tb == 0
                and ((tb * fin) % 8 == 0 or tb == batch)
                and ((tb * fout) % 8 == 0 or tb == batch))
    cands = [tb for tb in range(1, min(batch, 8) + 1) if ok(tb)]
    multi = [tb for tb in cands if batch // tb >= 2]
    if multi:
        return max(multi)          # >=2 batch tiles -> megacore on batch axis
    if cands:
        return max(cands)
    return batch                   # full-batch block is always layout-legal


def _pick_thw(hw_pad, tb, fin, fout, itemsize, budget, want_split):
    """HW tile: multiple of 128 dividing hw_pad, sized to the VMEM budget
    (double-buffered blocks + f32 temporaries), split >=2 ways when the batch
    axis alone can't feed both v7x cores."""
    per = 2 * tb * (fin + fout) * itemsize            # 2x-buffered in + out
    if fin * fout <= 256:
        per += (fin + 2) * tb * 4                     # hoisted f32 planes + acc
    else:
        per += (fin + fout) * 4                       # per-sample f32 temporaries
    cap = max(128, int(budget) // max(per, 1))
    cap = min(cap, 8192)                              # roofline plateau ~1024+
    limit = hw_pad // 2 if (want_split and hw_pad >= 256) else hw_pad
    best = 128
    t = 128
    while t <= hw_pad:
        if hw_pad % t == 0 and t <= cap and t <= limit:
            best = t
        t += 128
    return best


def dynaconv_forward(x, lat, w, b_lin, fout):
    """x: [B, fin, H, W] (NCHW), lat: [B, L],
    w: [fout*fin + fout, L] (nn.Linear weight), b_lin: [fout*fin + fout]."""
    B, fin, H, Wsp = x.shape
    L = lat.shape[1]
    k_size = fout * fin
    KB = k_size + fout
    HW = H * Wsp
    assert w.shape == (KB, L) and b_lin.shape == (KB,)

    # Dense, metadata-only 2D views (contiguous NCHW); pad HW to lane width.
    HW_pad = ((HW + 127) // 128) * 128
    xf = x.reshape(B * fin, HW)
    if HW_pad != HW:
        xf = jnp.pad(xf, ((0, 0), (0, HW_pad - HW)))
    bl = b_lin.reshape(1, KB)

    tb = _pick_tb(B, fin, fout)
    b_tiles = B // tb
    itemsize = jnp.dtype(x.dtype).itemsize

    block_budget, vmem_limit = _vmem_plan()
    resident = ((B * L + KB * L) * jnp.dtype(lat.dtype).itemsize
                + KB * 4 + tb * KB * 4)               # lat + W + bias + scratch
    block_budget = max(block_budget - resident, 2 * 1024 * 1024)

    thw = _pick_thw(HW_pad, tb, fin, fout, itemsize, block_budget,
                    want_split=(b_tiles < 2))
    hw_tiles = HW_pad // thw

    if b_tiles >= 2:
        dims = ("parallel", "arbitrary")   # ks cached in scratch per batch tile
        recompute_ks = False
    else:
        dims = ("parallel", "parallel")    # keep both v7x cores busy via HW axis
        recompute_ks = True

    lat_blocked = (tb % 8 == 0) or (tb == B)
    if lat_blocked:
        lat_spec = pl.BlockSpec((tb, L), lambda b, h: (b, 0))
    else:
        lat_spec = pl.BlockSpec((B, L), lambda b, h: (0, 0))   # full-resident

    kernel = functools.partial(
        _fused_dynaconv_kernel, fin=fin, fout=fout, tb=tb,
        recompute_ks=recompute_ks, lat_blocked=lat_blocked)

    cost = pl.CostEstimate(
        flops=2 * B * fout * fin * HW_pad + 2 * B * KB * L,
        transcendentals=0,
        bytes_accessed=itemsize * (B * fin * HW_pad + B * fout * HW_pad)
        + 4 * (B * L + KB * L + KB),
    )

    y = pl.pallas_call(
        kernel,
        out_shape=jax.ShapeDtypeStruct((B * fout, HW_pad), x.dtype),
        grid=(b_tiles, hw_tiles),
        in_specs=[
            lat_spec,                                              # lat
            pl.BlockSpec((KB, L), lambda b, h: (0, 0)),            # W (resident)
            pl.BlockSpec((1, KB), lambda b, h: (0, 0)),            # b_lin
            pl.BlockSpec((tb * fin, thw), lambda b, h: (b, h)),    # x (dense)
        ],
        out_specs=pl.BlockSpec((tb * fout, thw), lambda b, h: (b, h)),
        scratch_shapes=[pltpu.VMEM((tb, KB), jnp.float32)],
        compiler_params=pltpu.CompilerParams(
            dimension_semantics=dims,
            vmem_limit_bytes=vmem_limit,
        ),
        cost_estimate=cost,
    )(lat, w, bl, xf)

    if HW_pad != HW:
        y = y[:, :HW]
    return y.reshape(B, fout, H, Wsp)


if __name__ == "__main__":
    B, fin, fout, H, Wsp, LAT = 2, 4, 4, 16, 16, 32
    k_size = fout * fin
    KB = k_size + fout

    key = jax.random.PRNGKey(0)
    k1, k2, k3, k4 = jax.random.split(key, 4)
    x = jax.random.normal(k1, (B, fin, H, Wsp), dtype=jnp.float32)
    lat = jax.random.normal(k2, (B, LAT), dtype=jnp.float32)
    # nn.Linear(lat_size, k_size + b_size): weight [KB, LAT], bias [KB]
    w = jax.random.normal(k3, (KB, LAT), dtype=jnp.float32) * (1.0 / jnp.sqrt(LAT))
    b_lin = jax.random.normal(k4, (KB,), dtype=jnp.float32) * 0.01

    y = dynaconv_forward(x, lat, w, b_lin, fout)
    y = jax.block_until_ready(y)

    # Plain-JAX reference (mirrors the PyTorch forward exactly).
    ks_ref = lat @ w.T + b_lin
    k_ref = ks_ref[:, :k_size].reshape(B, fout, fin)
    bias_ref = ks_ref[:, k_size:].reshape(B, fout, 1, 1)
    y_ref = (k_ref[:, :, :, None, None] * x[:, None, :, :, :]).sum(axis=2) + bias_ref

    assert y.shape == (B, fout, H, Wsp)
    assert jnp.allclose(y, y_ref, atol=1e-4, rtol=1e-4), "Pallas/reference mismatch"
    print("KERNEL_OK")
</pallas_src>

<mosaic_0001>
module attributes {stable_mosaic.version = 11 : i64} {
  func.func @_fused_dynaconv_kernel(%arg0: i32, %arg1: i32, %arg2: memref<2x32xf32, #tpu.memory_space<vmem>>, %arg3: memref<20x32xf32, #tpu.memory_space<vmem>>, %arg4: memref<1x20xf32, #tpu.memory_space<vmem>>, %arg5: memref<8x128xf32, #tpu.memory_space<vmem>>, %arg6: memref<8x128xf32, #tpu.memory_space<vmem>>, %arg7: memref<2x20xf32, #tpu.memory_space<vmem>>) attributes {dimension_semantics = [#tpu.dimension_semantics<parallel>, #tpu.dimension_semantics<parallel>], iteration_bounds = array<i64: 1, 2>, scalar_prefetch = 0 : i64, scratch_operands = 1 : i64, tpu.core_type = #tpu.core_type<tc>, window_params = [{transform_indices = @transform_0, window_bounds = array<i64: 2, 32>}, {pipeline_mode = #tpu.pipeline_mode<synchronous>, transform_indices = @transform_1, window_bounds = array<i64: 20, 32>}, {pipeline_mode = #tpu.pipeline_mode<synchronous>, transform_indices = @transform_2, window_bounds = array<i64: 1, 20>}, {transform_indices = @transform_3, window_bounds = array<i64: 8, 128>}, {transform_indices = @transform_4, window_bounds = array<i64: 8, 128>}]} {
    %c0 = arith.constant 0 : index
    %c0_0 = arith.constant 0 : index
    %0 = vector.load %arg2[%c0, %c0_0] : memref<2x32xf32, #tpu.memory_space<vmem>>, vector<2x32xf32>
    %c0_1 = arith.constant 0 : index
    %c0_2 = arith.constant 0 : index
    %1 = vector.load %arg3[%c0_1, %c0_2] : memref<20x32xf32, #tpu.memory_space<vmem>>, vector<20x32xf32>
    %cst = arith.constant dense<0.000000e+00> : vector<2x20xf32>
    %2 = tpu.matmul %0, %1, %cst {dimension_numbers = #tpu.dot_dimension_numbers<[1], [1], [0], [0], [0, 0, 1, 0], [], []>} : vector<2x32xf32>, vector<20x32xf32>, vector<2x20xf32> -> vector<2x20xf32>
    %c0_3 = arith.constant 0 : index
    %c0_4 = arith.constant 0 : index
    %3 = vector.load %arg4[%c0_3, %c0_4] : memref<1x20xf32, #tpu.memory_space<vmem>>, vector<1x20xf32>
    %4 = vector.broadcast %3 : vector<1x20xf32> to vector<2x20xf32>
    %5 = arith.addf %2, %4 : vector<2x20xf32>
    %c0_5 = arith.constant 0 : index
    %c0_6 = arith.constant 0 : index
    %6 = vector.load %arg7[%c0_5, %c0_6] : memref<2x20xf32, #tpu.memory_space<vmem>>, vector<2x20xf32>
    tpu.vector_store %arg7[%c0_5, %c0_6], %5 {strides = array<i32>} : memref<2x20xf32, #tpu.memory_space<vmem>>, vector<2x20xf32>,
    %c0_7 = arith.constant 0 : index
    %c0_8 = arith.constant 0 : index
    %7 = vector.load %arg7[%c0_7, %c0_8] : memref<2x20xf32, #tpu.memory_space<vmem>>, vector<2x20xf32>
    %c0_9 = arith.constant 0 : index
    %c0_10 = arith.constant 0 : index
    %8 = tpu.strided_load %arg5[%c0_9, %c0_10] {strides = array<i32: 4, 1>} : memref<8x128xf32, #tpu.memory_space<vmem>>, vector<2x128xf32>
    %c1 = arith.constant 1 : index
    %c0_11 = arith.constant 0 : index
    %9 = tpu.strided_load %arg5[%c1, %c0_11] {strides = array<i32: 4, 1>} : memref<8x128xf32, #tpu.memory_space<vmem>>, vector<2x128xf32>
    %c2 = arith.constant 2 : index
    %c0_12 = arith.constant 0 : index
    %10 = tpu.strided_load %arg5[%c2, %c0_12] {strides = array<i32: 4, 1>} : memref<8x128xf32, #tpu.memory_space<vmem>>, vector<2x128xf32>
    %c3 = arith.constant 3 : index
    %c0_13 = arith.constant 0 : index
    %11 = tpu.strided_load %arg5[%c3, %c0_13] {strides = array<i32: 4, 1>} : memref<8x128xf32, #tpu.memory_space<vmem>>, vector<2x128xf32>
    %12 = vector.extract_strided_slice %7 {offsets = [0, 0], sizes = [2, 1], strides = [1, 1]} : vector<2x20xf32> to vector<2x1xf32>
    %13 = vector.broadcast %12 : vector<2x1xf32> to vector<2x128xf32>
    %14 = arith.mulf %13, %8 : vector<2x128xf32>
    %15 = vector.extract_strided_slice %7 {offsets = [0, 1], sizes = [2, 1], strides = [1, 1]} : vector<2x20xf32> to vector<2x1xf32>
    %16 = vector.broadcast %15 : vector<2x1xf32> to vector<2x128xf32>
    %17 = arith.mulf %16, %9 : vector<2x128xf32>
    %18 = arith.addf %14, %17 : vector<2x128xf32>
    %19 = vector.extract_strided_slice %7 {offsets = [0, 2], sizes = [2, 1], strides = [1, 1]} : vector<2x20xf32> to vector<2x1xf32>
    %20 = vector.broadcast %19 : vector<2x1xf32> to vector<2x128xf32>
    %21 = arith.mulf %20, %10 : vector<2x128xf32>
    %22 = arith.addf %18, %21 : vector<2x128xf32>
    %23 = vector.extract_strided_slice %7 {offsets = [0, 3], sizes = [2, 1], strides = [1, 1]} : vector<2x20xf32> to vector<2x1xf32>
    %24 = vector.broadcast %23 : vector<2x1xf32> to vector<2x128xf32>
    %25 = arith.mulf %24, %11 : vector<2x128xf32>
    %26 = arith.addf %22, %25 : vector<2x128xf32>
    %27 = vector.extract_strided_slice %7 {offsets = [0, 16], sizes = [2, 1], strides = [1, 1]} : vector<2x20xf32> to vector<2x1xf32>
    %28 = vector.broadcast %27 : vector<2x1xf32> to vector<2x128xf32>
    %29 = arith.addf %26, %28 : vector<2x128xf32>
    %c0_14 = arith.constant 0 : index
    %c0_15 = arith.constant 0 : index
    %30 = tpu.strided_load %arg6[%c0_14, %c0_15] {strides = array<i32: 4, 1>} : memref<8x128xf32, #tpu.memory_space<vmem>>, vector<2x128xf32>
    tpu.strided_store %arg6[%c0_14, %c0_15], %29 {strides = array<i32: 4, 1>} : memref<8x128xf32, #tpu.memory_space<vmem>>, vector<2x128xf32>
    %31 = vector.extract_strided_slice %7 {offsets = [0, 4], sizes = [2, 1], strides = [1, 1]} : vector<2x20xf32> to vector<2x1xf32>
    %32 = vector.broadcast %31 : vector<2x1xf32> to vector<2x128xf32>
    %33 = arith.mulf %32, %8 : vector<2x128xf32>
    %34 = vector.extract_strided_slice %7 {offsets = [0, 5], sizes = [2, 1], strides = [1, 1]} : vector<2x20xf32> to vector<2x1xf32>
    %35 = vector.broadcast %34 : vector<2x1xf32> to vector<2x128xf32>
    %36 = arith.mulf %35, %9 : vector<2x128xf32>
    %37 = arith.addf %33, %36 : vector<2x128xf32>
    %38 = vector.extract_strided_slice %7 {offsets = [0, 6], sizes = [2, 1], strides = [1, 1]} : vector<2x20xf32> to vector<2x1xf32>
    %39 = vector.broadcast %38 : vector<2x1xf32> to vector<2x128xf32>
    %40 = arith.mulf %39, %10 : vector<2x128xf32>
    %41 = arith.addf %37, %40 : vector<2x128xf32>
    %42 = vector.extract_strided_slice %7 {offsets = [0, 7], sizes = [2, 1], strides = [1, 1]} : vector<2x20xf32> to vector<2x1xf32>
    %43 = vector.broadcast %42 : vector<2x1xf32> to vector<2x128xf32>
    %44 = arith.mulf %43, %11 : vector<2x128xf32>
    %45 = arith.addf %41, %44 : vector<2x128xf32>
    %46 = vector.extract_strided_slice %7 {offsets = [0, 17], sizes = [2, 1], strides = [1, 1]} : vector<2x20xf32> to vector<2x1xf32>
    %47 = vector.broadcast %46 : vector<2x1xf32> to vector<2x128xf32>
    %48 = arith.addf %45, %47 : vector<2x128xf32>
    %c1_16 = arith.constant 1 : index
    %c0_17 = arith.constant 0 : index
    %49 = tpu.strided_load %arg6[%c1_16, %c0_17] {strides = array<i32: 4, 1>} : memref<8x128xf32, #tpu.memory_space<vmem>>, vector<2x128xf32>
    tpu.strided_store %arg6[%c1_16, %c0_17], %48 {strides = array<i32: 4, 1>} : memref<8x128xf32, #tpu.memory_space<vmem>>, vector<2x128xf32>
    %50 = vector.extract_strided_slice %7 {offsets = [0, 8], sizes = [2, 1], strides = [1, 1]} : vector<2x20xf32> to vector<2x1xf32>
    %51 = vector.broadcast %50 : vector<2x1xf32> to vector<2x128xf32>
    %52 = arith.mulf %51, %8 : vector<2x128xf32>
    %53 = vector.extract_strided_slice %7 {offsets = [0, 9], sizes = [2, 1], strides = [1, 1]} : vector<2x20xf32> to vector<2x1xf32>
    %54 = vector.broadcast %53 : vector<2x1xf32> to vector<2x128xf32>
    %55 = arith.mulf %54, %9 : vector<2x128xf32>
    %56 = arith.addf %52, %55 : vector<2x128xf32>
    %57 = vector.extract_strided_slice %7 {offsets = [0, 10], sizes = [2, 1], strides = [1, 1]} : vector<2x20xf32> to vector<2x1xf32>
    %58 = vector.broadcast %57 : vector<2x1xf32> to vector<2x128xf32>
    %59 = arith.mulf %58, %10 : vector<2x128xf32>
    %60 = arith.addf %56, %59 : vector<2x128xf32>
    %61 = vector.extract_strided_slice %7 {offsets = [0, 11], sizes = [2, 1], strides = [1, 1]} : vector<2x20xf32> to vector<2x1xf32>
    %62 = vector.broadcast %61 : vector<2x1xf32> to vector<2x128xf32>
    %63 = arith.mulf %62, %11 : vector<2x128xf32>
    %64 = arith.addf %60, %63 : vector<2x128xf32>
    %65 = vector.extract_strided_slice %7 {offsets = [0, 18], sizes = [2, 1], strides = [1, 1]} : vector<2x20xf32> to vector<2x1xf32>
    %66 = vector.broadcast %65 : vector<2x1xf32> to vector<2x128xf32>
    %67 = arith.addf %64, %66 : vector<2x128xf32>
    %c2_18 = arith.constant 2 : index
    %c0_19 = arith.constant 0 : index
    %68 = tpu.strided_load %arg6[%c2_18, %c0_19] {strides = array<i32: 4, 1>} : memref<8x128xf32, #tpu.memory_space<vmem>>, vector<2x128xf32>
    tpu.strided_store %arg6[%c2_18, %c0_19], %67 {strides = array<i32: 4, 1>} : memref<8x128xf32, #tpu.memory_space<vmem>>, vector<2x128xf32>
    %69 = vector.extract_strided_slice %7 {offsets = [0, 12], sizes = [2, 1], strides = [1, 1]} : vector<2x20xf32> to vector<2x1xf32>
    %70 = vector.broadcast %69 : vector<2x1xf32> to vector<2x128xf32>
    %71 = arith.mulf %70, %8 : vector<2x128xf32>
    %72 = vector.extract_strided_slice %7 {offsets = [0, 13], sizes = [2, 1], strides = [1, 1]} : vector<2x20xf32> to vector<2x1xf32>
    %73 = vector.broadcast %72 : vector<2x1xf32> to vector<2x128xf32>
    %74 = arith.mulf %73, %9 : vector<2x128xf32>
    %75 = arith.addf %71, %74 : vector<2x128xf32>
    %76 = vector.extract_strided_slice %7 {offsets = [0, 14], sizes = [2, 1], strides = [1, 1]} : vector<2x20xf32> to vector<2x1xf32>
    %77 = vector.broadcast %76 : vector<2x1xf32> to vector<2x128xf32>
    %78 = arith.mulf %77, %10 : vector<2x128xf32>
    %79 = arith.addf %75, %78 : vector<2x128xf32>
    %80 = vector.extract_strided_slice %7 {offsets = [0, 15], sizes = [2, 1], strides = [1, 1]} : vector<2x20xf32> to vector<2x1xf32>
    %81 = vector.broadcast %80 : vector<2x1xf32> to vector<2x128xf32>
    %82 = arith.mulf %81, %11 : vector<2x128xf32>
    %83 = arith.addf %79, %82 : vector<2x128xf32>
    %84 = vector.extract_strided_slice %7 {offsets = [0, 19], sizes = [2, 1], strides = [1, 1]} : vector<2x20xf32> to vector<2x1xf32>
    %85 = vector.broadcast %84 : vector<2x1xf32> to vector<2x128xf32>
    %86 = arith.addf %83, %85 : vector<2x128xf32>
    %c3_20 = arith.constant 3 : index
    %c0_21 = arith.constant 0 : index
    %87 = tpu.strided_load %arg6[%c3_20, %c0_21] {strides = array<i32: 4, 1>} : memref<8x128xf32, #tpu.memory_space<vmem>>, vector<2x128xf32>
    tpu.strided_store %arg6[%c3_20, %c0_21], %86 {strides = array<i32: 4, 1>} : memref<8x128xf32, #tpu.memory_space<vmem>>, vector<2x128xf32>
    return
  }
  func.func @transform_0(%arg0: i32, %arg1: i32) -> (i32, i32) {
    %c0_i32 = arith.constant 0 : i32
    %c0_i32_0 = arith.constant 0 : i32
    return %arg0, %c0_i32 : i32, i32
  }
  func.func @transform_1(%arg0: i32, %arg1: i32) -> (i32, i32) {
    %c0_i32 = arith.constant 0 : i32
    %c0_i32_0 = arith.constant 0 : i32
    %c0_i32_1 = arith.constant 0 : i32
    return %c0_i32, %c0_i32_0 : i32, i32
  }
  func.func @transform_2(%arg0: i32, %arg1: i32) -> (i32, i32) {
    %c0_i32 = arith.constant 0 : i32
    %c0_i32_0 = arith.constant 0 : i32
    %c0_i32_1 = arith.constant 0 : i32
    return %c0_i32, %c0_i32_0 : i32, i32
  }
  func.func @transform_3(%arg0: i32, %arg1: i32) -> (i32, i32) {
    %c0_i32 = arith.constant 0 : i32
    return %arg0, %arg1 : i32, i32
  }
  func.func @transform_4(%arg0: i32, %arg1: i32) -> (i32, i32) {
    %c0_i32 = arith.constant 0 : i32
    return %arg0, %arg1 : i32, i32
  }
}

</mosaic_0001>

<llo_original>
// kernel: tpu_custom_call.1
$region0: #{tpu_custom_call.1}
  #allocation0 [shape = 'u32[]', space=smem, size = 0x4, offset = 0x4, fixed_abs, tag = 'smem constant byte address 0x4 - core index']
  #allocation1 [shape = 'u32[72,128]{1,0:T(1,128)}', space=vmem, size = 0x9000, scoped, tag = 'internal scratch']
  #allocation2 [shape = 'f32[2,20]{1,0:T(2,128)}', space=vmem, size = 0x400, scoped, tag = 'scratch operand']
  %s0 = inlined_call_operand.hbm [shape: f32[2,32], index: 0, kind: input, shape index: {}]
  %s1 = inlined_call_operand.hbm [shape: f32[20,32], index: 1, kind: input, shape index: {}]
  %s2 = inlined_call_operand.vmem [shape: f32[1,20], index: 2, kind: input, shape index: {}]
  %s3 = inlined_call_operand.hbm [shape: f32[8,256], index: 3, kind: input, shape index: {}]
  %s4 = inlined_call_operand.hbm [shape: f32[8,256], index: 4, kind: output, shape index: {}]
  %s5 = sld [smem:[#allocation0]]
  $region61: #{tpu_custom_call.1} parent=0
    _
  %s7 = ssub.s32 1, %s5
  %s8 = scalar_select 0, %s7, %s5
  $region1: #{tpu_custom_call.1} parent=0
    #allocation3 [shape = 'u8[1024]{0}', space=vmem, size = 0x400, scoped, tag = 'input window, operand 0, single buffered']
    #allocation4 [shape = 's32[2]{0}', space=sflag, size = 0x8, scoped, tag = 'scoped memory for tpu_custom_call.1']
    #allocation5 [shape = 's32[2]{0}', space=sflag, size = 0x8, scoped, tag = 'scoped memory for tpu_custom_call.1']
    #allocation6 [shape = 'u8[12288]{0}', space=vmem, size = 0x3000, scoped, tag = 'input window, operand 1, single buffered']
    #allocation7 [shape = 's32[1]{0}', space=sflag, size = 0x4, scoped, tag = 'scoped memory for tpu_custom_call.1']
    #allocation8 [shape = 'u8[8192]{0}', space=vmem, size = 0x2000, scoped, tag = 'input window, operand 3']
    #allocation9 [shape = 'u8[8192]{0}', space=vmem, size = 0x2000, scoped, tag = 'output window, operand 0']
    %9 = vsyncpa [#allocation4], 0
    %10 = vsyncpa [#allocation7], 0
    %11 = vsyncpa [#allocation5], 0
    %s12 = scalar_lea.sflag [#allocation5], 1
    %13 = vsyncpa %s12, 0
    loop: start=0, step=1, limit=4
    $region2: #{tpu_custom_call.1} parent=1 // loop_pre_header
      _
    $region3: #{tpu_custom_call.1} parent=1 // loop_header
      %s15 = sphi 0, %s19
      %p16 = scmp.ge.s32.totalorder %s15, 4
      %s22 = sphi 0, %s34
      %s23 = sphi 0, %s30
      %s24 = sphi 0, %s22
      %s25 = sphi 0, %s23
      %s26 = sphi 0, %s24
      %s27 = sphi 0, %s25
      %s37 = sphi 0, %s39
      %s40 = sphi 0, %s37
      %s41 = sphi 0, %s40
      %s57 = sphi 0, %s41
      %s61 = sphi 0, %s61
      %s63 = sphi 0, %s61
      %s64 = sphi 0, %s63
      %s78 = sphi 0, %s64
      %s82 = sphi 0, %s82
      %s84 = sphi 0, %s82
      %s85 = sphi 0, %s84
      %s99 = sphi 0, %s85
      %s107 = sphi 0, %s109
      %s110 = sphi 0, %s107
      %s111 = sphi 0, %s110
      %s127 = sphi 0, %s111
      %s135 = sphi 0, %s137
      %s138 = sphi 0, %s135
      %s139 = sphi 0, %s138
      %s155 = sphi 0, %s139
    $region4: #{tpu_custom_call.1} parent=1 // loop_header_branch
      %18 = sbr.rel (%p16) target = $region8
    $region5: #{tpu_custom_call.1} parent=1 // loop_body
      %s20 = ssub.s32 %s15, 1
      %s21 = ssub.s32 %s15, 2
      %s28 = sadd.s32 1, %s23
      %p29 = scmp.ge.s32.totalorder %s28, 2
      %s30 = scalar_select %p29, 0, %s28
      %s31 = sadd.s32 1, %s22
      %s32 = scalar_select %p29, %s31, %s22
      %p33 = scmp.ge.s32.totalorder %s32, 1
      %s34 = scalar_select %p33, 0, %s32
      %s35 = ssub.s32 %s22, %s34
      %p36 = scmp.eq.s32.totalorder %s35, 0
      %s38 = sadd.s32 %s37, 1
      %s39 = scalar_select %p36, %s37, %s38
      %p42 = pneg %p36
      %p43 = scmp.eq.s32.totalorder %s15, 1
      %p44 = por %p42, %p43
      %p45 = scmp.ne.s32.totalorder %s37, %s40
      %p46 = scmp.eq.s32.totalorder %s15, 0
      %p47 = por %p45, %p46
      %p48 = scmp.ne.s32.totalorder %s37, %s40
      %p49 = scmp.eq.s32.totalorder %s20, 1
      %p50 = por %p48, %p49
      %p51 = scmp.ne.s32.totalorder %s40, %s41
      %p52 = scmp.eq.s32.totalorder %s20, 0
      %p53 = por %p51, %p52
      %p54 = scmp.ne.s32.totalorder %s40, %s41
      %p55 = scmp.eq.s32.totalorder %s21, 1
      %p56 = por %p54, %p55
      %p58 = scmp.ne.s32.totalorder %s41, %s57
      %p59 = scmp.eq.s32.totalorder %s21, 0
      %p60 = por %p58, %p59
      %s62 = sadd.s32 %s61, 1
      %p65 = scmp.eq.s32.totalorder %s15, 1
      %p66 = scmp.ne.s32.totalorder %s61, %s63
      %p67 = scmp.eq.s32.totalorder %s15, 0
      %p68 = por %p66, %p67
      %p69 = scmp.ne.s32.totalorder %s61, %s63
      %p70 = scmp.eq.s32.totalorder %s20, 1
      %p71 = por %p69, %p70
      %p72 = scmp.ne.s32.totalorder %s63, %s64
      %p73 = scmp.eq.s32.totalorder %s20, 0
      %p74 = por %p72, %p73
      %p75 = scmp.ne.s32.totalorder %s63, %s64
      %p76 = scmp.eq.s32.totalorder %s21, 1
      %p77 = por %p75, %p76
      %p79 = scmp.ne.s32.totalorder %s64, %s78
      %p80 = scmp.eq.s32.totalorder %s21, 0
      %p81 = por %p79, %p80
      %s83 = sadd.s32 %s82, 1
      %p86 = scmp.eq.s32.totalorder %s15, 1
      %p87 = scmp.ne.s32.totalorder %s82, %s84
      %p88 = scmp.eq.s32.totalorder %s15, 0
      %p89 = por %p87, %p88
      %p90 = scmp.ne.s32.totalorder %s82, %s84
      %p91 = scmp.eq.s32.totalorder %s20, 1
      %p92 = por %p90, %p91
      %p93 = scmp.ne.s32.totalorder %s84, %s85
      %p94 = scmp.eq.s32.totalorder %s20, 0
      %p95 = por %p93, %p94
      %p96 = scmp.ne.s32.totalorder %s84, %s85
      %p97 = scmp.eq.s32.totalorder %s21, 1
      %p98 = por %p96, %p97
      %p100 = scmp.ne.s32.totalorder %s85, %s99
      %p101 = scmp.eq.s32.totalorder %s21, 0
      %p102 = por %p100, %p101
      %s103 = ssub.s32 %s22, %s34
      %s104 = ssub.s32 %s23, %s30
      %s105 = sor.u32 %s103, %s104
      %p106 = scmp.eq.s32.totalorder %s105, 0
      %s108 = sadd.s32 %s107, 1
      %s109 = scalar_select %p106, %s107, %s108
      %p112 = pneg %p106
      %p113 = scmp.eq.s32.totalorder %s15, 1
      %p114 = por %p112, %p113
      %p115 = scmp.ne.s32.totalorder %s107, %s110
      %p116 = scmp.eq.s32.totalorder %s15, 0
      %p117 = por %p115, %p116
      %p118 = scmp.ne.s32.totalorder %s107, %s110
      %p119 = scmp.eq.s32.totalorder %s20, 1
      %p120 = por %p118, %p119
      %p121 = scmp.ne.s32.totalorder %s110, %s111
      %p122 = scmp.eq.s32.totalorder %s20, 0
      %p123 = por %p121, %p122
      %p124 = scmp.ne.s32.totalorder %s110, %s111
      %p125 = scmp.eq.s32.totalorder %s21, 1
      %p126 = por %p124, %p125
      %p128 = scmp.ne.s32.totalorder %s111, %s127
      %p129 = scmp.eq.s32.totalorder %s21, 0
      %p130 = por %p128, %p129
      %s131 = ssub.s32 %s22, %s34
      %s132 = ssub.s32 %s23, %s30
      %s133 = sor.u32 %s131, %s132
      %p134 = scmp.eq.s32.totalorder %s133, 0
      %s136 = sadd.s32 %s135, 1
      %s137 = scalar_select %p134, %s135, %s136
      %p140 = pneg %p134
      %p141 = scmp.eq.s32.totalorder %s15, 1
      %p142 = por %p140, %p141
      %p143 = scmp.ne.s32.totalorder %s135, %s138
      %p144 = scmp.eq.s32.totalorder %s15, 0
      %p145 = por %p143, %p144
      %p146 = scmp.ne.s32.totalorder %s135, %s138
      %p147 = scmp.eq.s32.totalorder %s20, 1
      %p148 = por %p146, %p147
      %p149 = scmp.ne.s32.totalorder %s138, %s139
      %p150 = scmp.eq.s32.totalorder %s20, 0
      %p151 = por %p149, %p150
      %p152 = scmp.ne.s32.totalorder %s138, %s139
      %p153 = scmp.eq.s32.totalorder %s21, 1
      %p154 = por %p152, %p153
      %p156 = scmp.ne.s32.totalorder %s139, %s155
      %p157 = scmp.eq.s32.totalorder %s21, 0
      %p158 = por %p156, %p157
      %p159 = scmp.le.s32.totalorder 1, %s15
      %p160 = scmp.lt.s32.totalorder %s15, 3
      %p161 = pnand %p159, %p160
      %p162 = pneg %p161
      // Predicated region
      $region9: #{tpu_custom_call.1} parent=5 // pred_check
        _
      $region10: #{tpu_custom_call.1} parent=5 // pred_check_branch
        %164 = sbr.rel (%p161) target = $region12
      $region11: #{tpu_custom_call.1} parent=5 // pred_region
        %s165 = ssub.s32 %s15, 1
        // Predicated region
        $region13: #{tpu_custom_call.1} parent=11 // pred_check
          %p166 = pneg %p53
        $region14: #{tpu_custom_call.1} parent=11 // pred_check_branch
          %168 = sbr.rel (%p166) target = $region16
        $region15: #{tpu_custom_call.1} parent=11 // pred_region
          %170 = vsyncadd [#allocation4], 0
          %s171 = smul.addr %s24, 2
          %s172 = scalar_lea.hbm %s0, %s171
          %s174 = sshll.u32 %s172, 4
          %s175 = int_to_ptr.hbm [resolvable:$true] %s174
          %s176 = sshll.u32 [#allocation3], 4
          %s177 = int_to_ptr.vmem [resolvable:$true] %s176
          %179 = dma.hbm_to_vmem [thread:$0]  %s175, 32, %s177, [#allocation4]
        $region16: #{tpu_custom_call.1} parent=11 // pred_fallthru
          _
        // Predicated region
        $region17: #{tpu_custom_call.1} parent=11 // pred_check
          %p180 = pneg %p74
        $region18: #{tpu_custom_call.1} parent=11 // pred_check_branch
          %182 = sbr.rel (%p180) target = $region20
        $region19: #{tpu_custom_call.1} parent=11 // pred_region
          %184 = vsyncadd [#allocation7], 0
          %s185 = sshll.u32 %s1, 4
          %s186 = int_to_ptr.hbm [resolvable:$true] %s185
          %s187 = sshll.u32 [#allocation6], 4
          %s188 = int_to_ptr.vmem [resolvable:$true] %s187
          %193 = dma.hbm_to_vmem [thread:$0]  %s186, 384, %s188, [#allocation7], 128, 128, 8
        $region20: #{tpu_custom_call.1} parent=11 // pred_fallthru
          _
        // Predicated region
        $region21: #{tpu_custom_call.1} parent=11 // pred_check
          %p194 = pneg %p95
        $region22: #{tpu_custom_call.1} parent=11 // pred_check_branch
          %196 = sbr.rel (%p194) target = $region24
        $region23: #{tpu_custom_call.1} parent=11 // pred_region
          _
        $region24: #{tpu_custom_call.1} parent=11 // pred_fallthru
          _
      $region12: #{tpu_custom_call.1} parent=5 // pred_fallthru
        _
      %p197 = scmp.lt.s32.totalorder %s15, 2
      // Predicated region
      $region25: #{tpu_custom_call.1} parent=5 // pred_check
        %p198 = pneg %p197
      $region26: #{tpu_custom_call.1} parent=5 // pred_check_branch
        %200 = sbr.rel (%p198) target = $region28
      $region27: #{tpu_custom_call.1} parent=5 // pred_region
        // Predicated region
        $region29: #{tpu_custom_call.1} parent=27 // pred_check
          %p201 = pneg %p117
        $region30: #{tpu_custom_call.1} parent=27 // pred_check_branch
          %203 = sbr.rel (%p201) target = $region32
        $region31: #{tpu_custom_call.1} parent=27 // pred_region
          %s204 = sand.u32 %s15, 1
          %s205 = scalar_lea.sflag [#allocation4], %s204
          %s206 = sand.u32 %s107, 1
          %s207 = smul.addr %s206, 8
          %s208 = scalar_lea.vmem [#allocation8], %s207
          %210 = vsyncadd %s205, 0
          %s211 = smul.addr %s22, 2
          %s212 = sadd.s32 %s23, %s211
          %s213 = smul.addr %s212, 8
          %s214 = scalar_lea.hbm %s3, %s213
          %s216 = sshll.u32 %s214, 4
          %s217 = int_to_ptr.hbm [resolvable:$true] %s216
          %s218 = sshll.u32 %s208, 4
          %s219 = int_to_ptr.vmem [resolvable:$true] %s218
          %221 = dma.hbm_to_vmem [thread:$0]  %s217, 128, %s219, %s205
        $region32: #{tpu_custom_call.1} parent=27 // pred_fallthru
          _
      $region28: #{tpu_custom_call.1} parent=5 // pred_fallthru
        _
      %p222 = scmp.le.s32.totalorder 1, %s15
      %p223 = scmp.lt.s32.totalorder %s15, 3
      %p224 = pnand %p222, %p223
      %p225 = pneg %p224
      // Predicated region
      $region33: #{tpu_custom_call.1} parent=5 // pred_check
        _
      $region34: #{tpu_custom_call.1} parent=5 // pred_check_branch
        %227 = sbr.rel (%p224) target = $region36
      $region35: #{tpu_custom_call.1} parent=5 // pred_region
        %s228 = ssub.s32 %s15, 1
        // Predicated region
        $region37: #{tpu_custom_call.1} parent=35 // pred_check
          %p229 = pneg %p53
        $region38: #{tpu_custom_call.1} parent=35 // pred_check_branch
          %231 = sbr.rel (%p229) target = $region40
        $region39: #{tpu_custom_call.1} parent=35 // pred_region
          %233 = dma.done [#allocation4], 32
        $region40: #{tpu_custom_call.1} parent=35 // pred_fallthru
          _
        // Predicated region
        $region41: #{tpu_custom_call.1} parent=35 // pred_check
          %p234 = pneg %p74
        $region42: #{tpu_custom_call.1} parent=35 // pred_check_branch
          %236 = sbr.rel (%p234) target = $region44
        $region43: #{tpu_custom_call.1} parent=35 // pred_region
          %238 = dma.done [#allocation7], 384
        $region44: #{tpu_custom_call.1} parent=35 // pred_fallthru
          _
        %s239 = sand.u32 %s20, 1
        %s240 = scalar_lea.sflag [#allocation4], %s239
        %s241 = sand.u32 %s110, 1
        %s242 = smul.addr %s241, 8
        %s243 = scalar_lea.vmem [#allocation8], %s242
        // Predicated region
        $region45: #{tpu_custom_call.1} parent=35 // pred_check
          %p244 = pneg %p123
        $region46: #{tpu_custom_call.1} parent=35 // pred_check_branch
          %246 = sbr.rel (%p244) target = $region48
        $region47: #{tpu_custom_call.1} parent=35 // pred_region
          %248 = dma.done %s240, 128
        $region48: #{tpu_custom_call.1} parent=35 // pred_fallthru
          _
        %p249 = pneg %p53
        %p250 = pneg %p50
        %p251 = pneg %p74
        %p252 = pneg %p71
        %p253 = pneg %p95
        %p254 = pneg %p92
        %s255 = sand.u32 %s20, 1
        %s256 = scalar_lea.sflag [#allocation4], %s255
        %s257 = sand.u32 %s110, 1
        %s258 = smul.addr %s257, 8
        %s259 = scalar_lea.vmem [#allocation8], %s258
        %p260 = pneg %p123
        %p261 = pneg %p120
        %p262 = pneg %p151
        %p263 = pneg %p148
        %s264 = sand.u32 %s138, 1
        %s265 = scalar_lea.sflag [#allocation5], %s264
        %s266 = sand.u32 %s138, 1
        %s267 = smul.addr %s266, 8
        %s268 = scalar_lea.vmem [#allocation9], %s267
        %v269 = vld [vmem:[#allocation3] sm:$0x3]
        %v270 = vld [vmem:[#allocation6] sm:$0xff]
        %v271 = vld [vmem:[#allocation6 + $0x8] sm:$0xff]
        %v272 = vld [vmem:[#allocation6 + $0x10] sm:$0xf]
        %v273 = vld [vmem:[%s2] sm:$0x1]
        %v275 = vperm.slane %v273, 0
        %vm277 = vcmask 261120
        %v279 = vsel %vm277, %v269, 0
        %v282 = vsel %vm277, %v270, 0
        %v285 = vsel %vm277, %v271, 0
        %v288 = vsel %vm277, %v272, 0
        %290 = vmatpush.xpose.msra.mxu0 0.0
        %291 = vmatpush.xpose.msra.mxu0 0.0
        %292 = vmatpush.xpose.msra.mxu0 0.0
        %293 = vmatpush.xpose.msra.mxu0 0.0
        %294 = vmatpush.xpose.msra.mxu0 0.0
        %295 = vmatpush.xpose.msra.mxu0 0.0
        %296 = vmatpush.xpose.msra.mxu0 0.0
        %297 = vmatpush.xpose.msra.mxu0 0.0
        %298 = vmatpush.xpose.msra.mxu0 0.0
        %299 = vmatpush.xpose.msra.mxu0 0.0
        %300 = vmatpush.xpose.msra.mxu0 0.0
        %301 = vmatpush.xpose.msra.mxu0 0.0
        %302 = vmatpush.xpose.msra.mxu0 0.0
        %303 = vmatpush.xpose.msra.mxu0 %v288
        %304 = vmatpush.xpose.msra.mxu0 %v285
        %305 = vmatpush.xpose.msra.mxu0 %v282
        %306 = vmatmul.f32.gmra.mxu0 %v279
        %v307 = vpop.f32.mrf.mxu0
        %v308 = vadd.f32 %v275, %v307
        %309 = vdwg.mxu0
        %vm310 = vcmask 156672
        %311 = vst.msk [vmem:[#allocation2] sm:$0x3] %vm310, %v308
        %v312 = vld [vmem:[#allocation2] sm:$0x3]
        %v313 = vld [vmem:[%s243] ss:$4 sm:$0x3]
        %s314 = scalar_lea.vmem %s243, 1 [#allocation8]
        %v315 = vld [vmem:[%s314] ss:$4 sm:$0x3]
        %s316 = scalar_lea.vmem %s243, 2 [#allocation8]
        %v317 = vld [vmem:[%s316] ss:$4 sm:$0x3]
        %s318 = scalar_lea.vmem %s243, 3 [#allocation8]
        %v319 = vld [vmem:[%s318] ss:$4 sm:$0x3]
        %321 = vset.pattern.permute.xlu0 0
        %322 = vperm.xlu0 %321, %v312
        %v323 = vpop.permute.xlu0 %322
        %v325 = vmul.f32 %v323, %v313
        %326 = vset.pattern.permute.xlu0 1
        %327 = vperm.xlu0 %326, %v312
        %v328 = vpop.permute.xlu0 %327
        %v330 = vmul.f32 %v328, %v315
        %v331 = vadd.f32 %v325, %v330
        %332 = vset.pattern.permute.xlu0 2
        %333 = vperm.xlu0 %332, %v312
        %v334 = vpop.permute.xlu0 %333
        %v336 = vmul.f32 %v334, %v317
        %v337 = vadd.f32 %v331, %v336
        %338 = vset.pattern.permute.xlu0 3
        %339 = vperm.xlu0 %338, %v312
        %v340 = vpop.permute.xlu0 %339
        %v342 = vmul.f32 %v340, %v319
        %v343 = vadd.f32 %v337, %v342
        %344 = vset.pattern.permute.xlu0 16
        %345 = vperm.xlu0 %344, %v312
        %v346 = vpop.permute.xlu0 %345
        %v348 = vadd.f32 %v343, %v346
        %349 = vst [vmem:[%s268] ss:$4 sm:$0x3] %v348
        %350 = vset.pattern.permute.xlu0 4
        %351 = vperm.xlu0 %350, %v312
        %v352 = vpop.permute.xlu0 %351
        %v354 = vmul.f32 %v352, %v313
        %355 = vset.pattern.permute.xlu0 5
        %356 = vperm.xlu0 %355, %v312
        %v357 = vpop.permute.xlu0 %356
        %v359 = vmul.f32 %v357, %v315
        %v360 = vadd.f32 %v354, %v359
        %361 = vset.pattern.permute.xlu0 6
        %362 = vperm.xlu0 %361, %v312
        %v363 = vpop.permute.xlu0 %362
        %v365 = vmul.f32 %v363, %v317
        %v366 = vadd.f32 %v360, %v365
        %367 = vset.pattern.permute.xlu0 7
        %368 = vperm.xlu0 %367, %v312
        %v369 = vpop.permute.xlu0 %368
        %v371 = vmul.f32 %v369, %v319
        %v372 = vadd.f32 %v366, %v371
        %373 = vset.pattern.permute.xlu0 17
        %374 = vperm.xlu0 %373, %v312
        %v375 = vpop.permute.xlu0 %374
        %v377 = vadd.f32 %v372, %v375
        %s378 = scalar_lea.vmem %s268, 1 [#allocation9]
        %379 = vst [vmem:[%s378] ss:$4 sm:$0x3] %v377
        %380 = vset.pattern.permute.xlu0 8
        %381 = vperm.xlu0 %380, %v312
        %v382 = vpop.permute.xlu0 %381
        %v384 = vmul.f32 %v382, %v313
        %385 = vset.pattern.permute.xlu0 9
        %386 = vperm.xlu0 %385, %v312
        %v387 = vpop.permute.xlu0 %386
        %v389 = vmul.f32 %v387, %v315
        %v390 = vadd.f32 %v384, %v389
        %391 = vset.pattern.permute.xlu0 10
        %392 = vperm.xlu0 %391, %v312
        %v393 = vpop.permute.xlu0 %392
        %v395 = vmul.f32 %v393, %v317
        %v396 = vadd.f32 %v390, %v395
        %397 = vset.pattern.permute.xlu0 11
        %398 = vperm.xlu0 %397, %v312
        %v399 = vpop.permute.xlu0 %398
        %v401 = vmul.f32 %v399, %v319
        %v402 = vadd.f32 %v396, %v401
        %403 = vset.pattern.permute.xlu0 18
        %404 = vperm.xlu0 %403, %v312
        %v405 = vpop.permute.xlu0 %404
        %v407 = vadd.f32 %v402, %v405
        %s408 = scalar_lea.vmem %s268, 2 [#allocation9]
        %409 = vst [vmem:[%s408] ss:$4 sm:$0x3] %v407
        %410 = vset.pattern.permute.xlu0 12
        %411 = vperm.xlu0 %410, %v312
        %v412 = vpop.permute.xlu0 %411
        %v414 = vmul.f32 %v412, %v313
        %415 = vset.pattern.permute.xlu0 13
        %416 = vperm.xlu0 %415, %v312
        %v417 = vpop.permute.xlu0 %416
        %v419 = vmul.f32 %v417, %v315
        %v420 = vadd.f32 %v414, %v419
        %421 = vset.pattern.permute.xlu0 14
        %422 = vperm.xlu0 %421, %v312
        %v423 = vpop.permute.xlu0 %422
        %v425 = vmul.f32 %v423, %v317
        %v426 = vadd.f32 %v420, %v425
        %427 = vset.pattern.permute.xlu0 15
        %428 = vperm.xlu0 %427, %v312
        %v429 = vpop.permute.xlu0 %428
        %v431 = vmul.f32 %v429, %v319
        %v432 = vadd.f32 %v426, %v431
        %433 = vset.pattern.permute.xlu0 19
        %434 = vperm.xlu0 %433, %v312
        %v435 = vpop.permute.xlu0 %434
        %v437 = vadd.f32 %v432, %v435
        %s438 = scalar_lea.vmem %s268, 3 [#allocation9]
        %439 = vst [vmem:[%s438] ss:$4 sm:$0x3] %v437
        %s440 = sand.u32 %s138, 1
        %s441 = scalar_lea.sflag [#allocation5], %s440
        %s442 = sand.u32 %s138, 1
        %s443 = smul.addr %s442, 8
        %s444 = scalar_lea.vmem [#allocation9], %s443
        // Predicated region
        $region49: #{tpu_custom_call.1} parent=35 // pred_check
          %p445 = pneg %p148
        $region50: #{tpu_custom_call.1} parent=35 // pred_check_branch
          %447 = sbr.rel (%p445) target = $region52
        $region51: #{tpu_custom_call.1} parent=35 // pred_region
          %449 = vsyncadd %s441, 0
          %s450 = smul.addr %s24, 2
          %s451 = sadd.s32 %s25, %s450
          %s452 = smul.addr %s451, 8
          %s453 = scalar_lea.hbm %s4, %s452
          %s455 = sshll.u32 %s444, 4
          %s456 = int_to_ptr.vmem [resolvable:$true] %s455
          %s457 = sshll.u32 %s453, 4
          %s458 = int_to_ptr.hbm [resolvable:$true] %s457
          %460 = dma.vmem_to_hbm [thread:$0]  %s456, 128, %s458, %s441
        $region52: #{tpu_custom_call.1} parent=35 // pred_fallthru
          _
      $region36: #{tpu_custom_call.1} parent=5 // pred_fallthru
        _
      %p461 = scmp.le.s32.totalorder 2, %s15
      // Predicated region
      $region53: #{tpu_custom_call.1} parent=5 // pred_check
        %p462 = pneg %p461
      $region54: #{tpu_custom_call.1} parent=5 // pred_check_branch
        %464 = sbr.rel (%p462) target = $region56
      $region55: #{tpu_custom_call.1} parent=5 // pred_region
        %s465 = ssub.s32 %s15, 2
        // Predicated region
        $region57: #{tpu_custom_call.1} parent=55 // pred_check
          %p466 = pneg %p154
        $region58: #{tpu_custom_call.1} parent=55 // pred_check_branch
          %468 = sbr.rel (%p466) target = $region60
        $region59: #{tpu_custom_call.1} parent=55 // pred_region
          %s469 = sand.u32 %s139, 1
          %s470 = scalar_lea.sflag [#allocation5], %s469
          %s471 = sand.u32 %s139, 1
          %s472 = smul.addr %s471, 8
          %s473 = scalar_lea.vmem [#allocation9], %s472
          %475 = dma.done %s470, 128
        $region60: #{tpu_custom_call.1} parent=55 // pred_fallthru
          _
      $region56: #{tpu_custom_call.1} parent=5 // pred_fallthru
        _
    $region6: #{tpu_custom_call.1} parent=1 // loop_footer
      %s19 = sadd.s32 1, %s15
    $region7: #{tpu_custom_call.1} parent=1 // loop_footer_branch
      %14 = sbr.rel target = $region3
    $region8: #{tpu_custom_call.1} parent=1 // loop_exit
      _
    %476 = vsyncpa [#allocation4], 1
    %s477 = scalar_lea.sflag [#allocation4], 1
    %478 = vsyncpa %s477, 1
    %479 = vsyncpa [#allocation7], 1
    %480 = vsyncpa [#allocation5], 1
    %s481 = scalar_lea.sflag [#allocation5], 1
    %482 = vsyncpa %s481, 1

</llo_original>
